<compile_context>
chip_gen: v7x
topology: tpu7x:2x2x1
jax: 0.10.0
libtpu: 0.0.40
codegen_flags: <defaults>
</compile_context>

<pallas_src>
import functools

import jax
import jax.numpy as jnp
from jax import lax
from jax.experimental import pallas as pl
from jax.experimental.pallas import tpu as pltpu


def _pick_tile(dim, cap, aligns):
    """Largest tile <= cap that divides dim, trying alignments in order
    (e.g. (256, 128, 8)).  Falls back to the full dim (always legal)."""
    if dim <= cap:
        return dim
    for align in aligns:
        t = (cap // align) * align
        while t >= align:
            if dim % t == 0:
                return t
            t -= align
    # TODO(synk): pad awkward dims (e.g. N=197 ViT tokens) instead of falling
    # back to a full-extent block that may blow the VMEM budget.
    return dim


def _default_vmem_limit():
    """Explicit scoped-VMEM limit: generous on v5e/v6e (128 MiB physical),
    headroom-safe on v7x (64 MiB per TensorCore)."""
    try:
        cap = int(pltpu.get_tpu_info().vmem_capacity_bytes)
        return min(cap - (8 << 20), 100 << 20)
    except Exception:
        return 48 << 20  # safe on every generation


# ---------------------- tiled linear (matmul + optional bias) ---------------------- #

def _linear_kernel_noacc(*refs, has_bias):
    # Full-K blocks: one MXU pass, write the output once. No scratch, no pl.when.
    if has_bias:
        x_ref, w_ref, b_ref, o_ref = refs
    else:
        x_ref, w_ref, o_ref = refs
        b_ref = None
    acc = jnp.dot(x_ref[...], w_ref[...], preferred_element_type=jnp.float32)
    if b_ref is not None:
        acc = acc + b_ref[...].astype(jnp.float32)
    o_ref[...] = acc.astype(o_ref.dtype)


def _linear_kernel_acc(*refs, has_bias):
    # K-tiled path: f32 accumulator scratch across the trailing reduction axis.
    if has_bias:
        x_ref, w_ref, b_ref, o_ref, acc_ref = refs
    else:
        x_ref, w_ref, o_ref, acc_ref = refs
        b_ref = None

    k = pl.program_id(2)

    @pl.when(k == 0)
    def _init():
        acc_ref[...] = jnp.zeros_like(acc_ref)

    acc_ref[...] += jnp.dot(x_ref[...], w_ref[...],
                            preferred_element_type=jnp.float32)

    @pl.when(k == pl.num_programs(2) - 1)
    def _finalize():
        acc = acc_ref[...]
        if b_ref is not None:
            acc = acc + b_ref[...].astype(jnp.float32)
        o_ref[...] = acc.astype(o_ref.dtype)


def pallas_linear(x, w, b=None, *, tm=256, tn=256, tk=512):
    """y = x @ w (+ b).  x: (M, K), w: (K, N), b: (N,) or None."""
    M, K = x.shape
    Kw, N = w.shape
    assert K == Kw
    tm = _pick_tile(M, tm, (256, 128, 8))
    tn = _pick_tile(N, tn, (256, 128))
    vmem_limit = _default_vmem_limit()
    has_bias = b is not None
    args = [x, w] + ([b.reshape(1, N)] if has_bias else [])
    itemsize = x.dtype.itemsize

    # Drop the K grid axis whenever full-K operand blocks (double-buffered) fit
    # comfortably: fewer ~0.35us grid steps, no accumulator read-modify-write.
    if K * (tm + tn) * itemsize * 2 <= (8 << 20):
        in_specs = [pl.BlockSpec((tm, K), lambda i, j: (i, 0)),
                    pl.BlockSpec((K, tn), lambda i, j: (0, j))]
        if has_bias:
            in_specs.append(pl.BlockSpec((1, tn), lambda i, j: (0, j)))
        return pl.pallas_call(
            functools.partial(_linear_kernel_noacc, has_bias=has_bias),
            out_shape=jax.ShapeDtypeStruct((M, N), x.dtype),
            grid=(M // tm, N // tn),
            in_specs=in_specs,
            out_specs=pl.BlockSpec((tm, tn), lambda i, j: (i, j)),
            compiler_params=pltpu.CompilerParams(
                dimension_semantics=("parallel", "parallel"),
                vmem_limit_bytes=vmem_limit),
        )(*args)

    tk = _pick_tile(K, tk, (256, 128))
    in_specs = [pl.BlockSpec((tm, tk), lambda i, j, k: (i, k)),
                pl.BlockSpec((tk, tn), lambda i, j, k: (k, j))]
    if has_bias:
        in_specs.append(pl.BlockSpec((1, tn), lambda i, j, k: (0, j)))
    return pl.pallas_call(
        functools.partial(_linear_kernel_acc, has_bias=has_bias),
        out_shape=jax.ShapeDtypeStruct((M, N), x.dtype),
        grid=(M // tm, N // tn, K // tk),
        in_specs=in_specs,
        out_specs=pl.BlockSpec((tm, tn), lambda i, j, k: (i, j)),
        scratch_shapes=[pltpu.VMEM((tm, tn), jnp.float32)],
        compiler_params=pltpu.CompilerParams(
            dimension_semantics=("parallel", "parallel", "arbitrary"),
            vmem_limit_bytes=vmem_limit),
    )(*args)


# --------------------- fused multi-head attention (flash-style) -------------------- #

def _attn_kernel(q_ref, k_ref, v_ref, o_ref, m_ref, l_ref, acc_ref, *,
                 num_heads, scale, exp_dtype):
    # q_ref: (1, tq,  C) slab of qkv columns [0, C)      (resident across kv steps)
    # k_ref: (1, tkv, C) slab of qkv columns [C, 2C)
    # v_ref: (1, tkv, C) slab of qkv columns [2C, 3C)
    # o_ref: (1, tq,  C) output (heads merged in the column layout)
    # m_ref/l_ref: (H, tq, 1) f32 running max / softmax denom
    # acc_ref   : (H, tq, D) f32 running numerator
    kv = pl.program_id(2)

    @pl.when(kv == 0)
    def _init():
        m_ref[...] = jnp.full_like(m_ref, -jnp.inf)
        l_ref[...] = jnp.zeros_like(l_ref)
        acc_ref[...] = jnp.zeros_like(acc_ref)

    q = q_ref[0] * jnp.asarray(scale, q_ref.dtype)   # fold scale into q (tq*C, not tq*tkv)
    k = k_ref[0]
    v = v_ref[0]
    C = q.shape[-1]
    D = C // num_heads

    for h in range(num_heads):        # static unroll over heads
        qh = q[:, h * D:(h + 1) * D]
        kh = k[:, h * D:(h + 1) * D]
        vh = v[:, h * D:(h + 1) * D]
        # QK^T without an explicit k transpose: contract the last dims directly.
        s = lax.dot_general(qh, kh, (((1,), (1,)), ((), ())),
                            preferred_element_type=jnp.float32)        # (tq, tkv) f32
        m_prev = m_ref[h]                                               # (tq, 1) f32
        m_new = jnp.maximum(m_prev, jnp.max(s, axis=-1, keepdims=True))
        alpha = jnp.exp(m_prev - m_new)                                 # f32 rescale
        # exp in bf16 when activations are bf16 (EUP-bound at D=64 on v6e/v7x);
        # max/sum stats and the accumulator stay f32.
        p = jnp.exp((s - m_new).astype(exp_dtype))
        l_ref[h] = alpha * l_ref[h] + jnp.sum(p.astype(jnp.float32),
                                              axis=-1, keepdims=True)
        acc_ref[h] = alpha * acc_ref[h] + jnp.dot(p.astype(vh.dtype), vh,
                                                  preferred_element_type=jnp.float32)
        m_ref[h] = m_new

    @pl.when(kv == pl.num_programs(2) - 1)
    def _finalize():
        # Per-head reciprocal + downcast first, then one lane-dense (tq, C) store.
        outs = [(acc_ref[h] * pl.reciprocal(l_ref[h], approx=True)).astype(o_ref.dtype)
                for h in range(num_heads)]
        o_ref[0] = jnp.concatenate(outs, axis=-1)


def pallas_attention(qkv, num_heads, scale, *, tq=256, tkv=512):
    """qkv: (B, N, 3C) laid out as [q | k | v].  Returns (B, N, C), heads merged."""
    B, N, C3 = qkv.shape
    C = C3 // 3
    D = C // num_heads
    tq = _pick_tile(N, tq, (128, 8))     # 128-aligned q tiles -> whole vregs / MXU rows
    tkv = _pick_tile(N, tkv, (128, 8))
    grid = (B, N // tq, N // tkv)        # B leading (parallel), kv trailing (reduction)
    exp_dtype = jnp.bfloat16 if qkv.dtype == jnp.bfloat16 else jnp.float32

    q_spec = pl.BlockSpec((1, tq, C), lambda b, qi, kv: (b, qi, 0))
    k_spec = pl.BlockSpec((1, tkv, C), lambda b, qi, kv: (b, kv, 1))
    v_spec = pl.BlockSpec((1, tkv, C), lambda b, qi, kv: (b, kv, 2))
    o_spec = pl.BlockSpec((1, tq, C), lambda b, qi, kv: (b, qi, 0))

    return pl.pallas_call(
        functools.partial(_attn_kernel, num_heads=num_heads, scale=scale,
                          exp_dtype=exp_dtype),
        out_shape=jax.ShapeDtypeStruct((B, N, C), qkv.dtype),
        grid=grid,
        in_specs=[q_spec, k_spec, v_spec],
        out_specs=o_spec,
        scratch_shapes=[pltpu.VMEM((num_heads, tq, 1), jnp.float32),   # running max
                        pltpu.VMEM((num_heads, tq, 1), jnp.float32),   # running denom
                        pltpu.VMEM((num_heads, tq, D), jnp.float32)],  # running numer
        compiler_params=pltpu.CompilerParams(
            dimension_semantics=("parallel", "parallel", "arbitrary"),
            vmem_limit_bytes=_default_vmem_limit()),
    )(qkv, qkv, qkv)


# ----------------------------------- forward --------------------------------------- #

def attention_forward(x, params, num_heads):
    """Forward pass of the Attention module.

    x: (B, N, C)
    params: w_qkv (C, 3C), b_qkv (3C,) or None, w_proj (C, C), b_proj (C,)
    """
    B, N, C = x.shape
    head_dim = C // num_heads
    scale = head_dim ** -0.5

    # qkv projection (bias skipped entirely when qkv_bias=False)
    qkv = pallas_linear(x.reshape(B * N, C), params["w_qkv"], params.get("b_qkv"))
    qkv = qkv.reshape(B, N, 3 * C)          # free reshape, no data movement

    # q_norm / k_norm are nn.Identity() (qk_norm=False); attn_drop/proj_drop = 0.

    # Flash-style fused SDPA: head split/merge via BlockSpec index_maps, online
    # softmax over the kv grid axis, no XLA-level transposes.
    o = pallas_attention(qkv, num_heads, scale)            # (B, N, C)

    # output projection (with bias)
    out = pallas_linear(o.reshape(B * N, C), params["w_proj"], params["b_proj"])
    return out.reshape(B, N, C)


# ---------------------------------- reference --------------------------------------- #

def attention_reference(x, params, num_heads):
    B, N, C = x.shape
    head_dim = C // num_heads
    scale = head_dim ** -0.5
    qkv = x @ params["w_qkv"]
    if params.get("b_qkv") is not None:
        qkv = qkv + params["b_qkv"]
    qkv = qkv.reshape(B, N, 3, num_heads, head_dim).transpose(2, 0, 3, 1, 4)
    q, k, v = qkv[0], qkv[1], qkv[2]
    s = jnp.einsum("bhnd,bhmd->bhnm", q, k) * scale
    p = jax.nn.softmax(s, axis=-1)
    o = jnp.einsum("bhnm,bhmd->bhnd", p, v)
    o = o.transpose(0, 2, 1, 3).reshape(B, N, C)
    return o @ params["w_proj"] + params["b_proj"]


# ------------------------------------- main ------------------------------------------ #

if __name__ == "__main__":
    # Small but lane-aligned shapes: B=2, N=128 tokens, C=256 channels, 4 heads (D=64).
    B, N, C = 2, 128, 256
    num_heads = 4

    key = jax.random.PRNGKey(0)
    kx, kq, kp, kb = jax.random.split(key, 4)

    x = jax.random.normal(kx, (B, N, C), dtype=jnp.float32)

    # Module shapes: qkv = Linear(C, 3C, bias=False), proj = Linear(C, C, bias=True).
    params = {
        "w_qkv": jax.random.normal(kq, (C, 3 * C), dtype=jnp.float32) * 0.05,
        "b_qkv": None,  # qkv_bias=False -> bias skipped entirely in the kernel
        "w_proj": jax.random.normal(kp, (C, C), dtype=jnp.float32) * 0.05,
        "b_proj": jax.random.normal(kb, (C,), dtype=jnp.float32) * 0.05,
    }

    # f32 correctness check against the pure-JAX reference.
    out = attention_forward(x, params, num_heads)
    out = jax.block_until_ready(out)
    ref = attention_reference(x, params, num_heads)
    assert out.shape == (B, N, C)
    # Tolerance covers the approximate (EUP) reciprocal in the softmax epilogue and
    # default MXU matmul precision differences vs the XLA reference.
    assert jnp.allclose(out, ref, atol=1e-2, rtol=1e-2), "mismatch vs reference"

    # bf16 path (the recommended perf configuration on v6e/v7x: bf16 operands,
    # bf16 exp, f32 stats/accumulation) -- compile/run coverage.
    x_bf = x.astype(jnp.bfloat16)
    params_bf = {k: (None if v is None else v.astype(jnp.bfloat16))
                 for k, v in params.items()}
    out_bf = attention_forward(x_bf, params_bf, num_heads)
    out_bf = jax.block_until_ready(out_bf)
    assert out_bf.shape == (B, N, C)
    assert bool(jnp.isfinite(out_bf.astype(jnp.float32)).all()), "bf16 path produced non-finite values"

    print("KERNEL_OK")
</pallas_src>

<mosaic_0001>
module attributes {stable_mosaic.version = 11 : i64} {
  func.func @_linear_kernel_noacc(%arg0: i32, %arg1: i32, %arg2: memref<256x256xf32, #tpu.memory_space<vmem>>, %arg3: memref<256x256xf32, #tpu.memory_space<vmem>>, %arg4: memref<256x256xf32, #tpu.memory_space<vmem>>) attributes {dimension_semantics = [#tpu.dimension_semantics<parallel>, #tpu.dimension_semantics<parallel>], iteration_bounds = array<i64: 1, 3>, scalar_prefetch = 0 : i64, scratch_operands = 0 : i64, tpu.core_type = #tpu.core_type<tc>, window_params = [{transform_indices = @transform_0, window_bounds = array<i64: 256, 256>}, {transform_indices = @transform_1, window_bounds = array<i64: 256, 256>}, {transform_indices = @transform_2, window_bounds = array<i64: 256, 256>}]} {
    %c0 = arith.constant 0 : index
    %c0_0 = arith.constant 0 : index
    %0 = vector.load %arg2[%c0, %c0_0] : memref<256x256xf32, #tpu.memory_space<vmem>>, vector<256x256xf32>
    %c0_1 = arith.constant 0 : index
    %c0_2 = arith.constant 0 : index
    %1 = vector.load %arg3[%c0_1, %c0_2] : memref<256x256xf32, #tpu.memory_space<vmem>>, vector<256x256xf32>
    %cst = arith.constant dense<0.000000e+00> : vector<256x256xf32>
    %2 = tpu.matmul %0, %1, %cst {dimension_numbers = #tpu.dot_dimension_numbers<[1], [0], [0], [1], [0, 0, 1, 1], [], []>} : vector<256x256xf32>, vector<256x256xf32>, vector<256x256xf32> -> vector<256x256xf32>
    %c0_3 = arith.constant 0 : index
    %c0_4 = arith.constant 0 : index
    %3 = vector.load %arg4[%c0_3, %c0_4] : memref<256x256xf32, #tpu.memory_space<vmem>>, vector<256x256xf32>
    tpu.vector_store %arg4[%c0_3, %c0_4], %2 {strides = array<i32>} : memref<256x256xf32, #tpu.memory_space<vmem>>, vector<256x256xf32>,
    return
  }
  func.func @transform_0(%arg0: i32, %arg1: i32) -> (i32, i32) {
    %c0_i32 = arith.constant 0 : i32
    %c0_i32_0 = arith.constant 0 : i32
    return %arg0, %c0_i32 : i32, i32
  }
  func.func @transform_1(%arg0: i32, %arg1: i32) -> (i32, i32) {
    %c0_i32 = arith.constant 0 : i32
    %c0_i32_0 = arith.constant 0 : i32
    return %c0_i32, %arg1 : i32, i32
  }
  func.func @transform_2(%arg0: i32, %arg1: i32) -> (i32, i32) {
    %c0_i32 = arith.constant 0 : i32
    return %arg0, %arg1 : i32, i32
  }
}

</mosaic_0001>

<llo_original>
// kernel: tpu_custom_call.1
$region0: #{tpu_custom_call.1}
  #allocation0 [shape = 'u32[]', space=smem, size = 0x4, offset = 0x4, fixed_abs, tag = 'smem constant byte address 0x4 - core index']
  #allocation1 [shape = 'u32[144,128]{1,0:T(1,128)}', space=vmem, size = 0x12000, scoped, tag = 'internal scratch']
  %s0 = inlined_call_operand.hbm [shape: f32[256,256], index: 0, kind: input, shape index: {}]
  %s1 = inlined_call_operand.hbm [shape: f32[256,768], index: 1, kind: input, shape index: {}]
  %s2 = inlined_call_operand.hbm [shape: f32[256,768], index: 2, kind: output, shape index: {}]
  %s3 = sld [smem:[#allocation0]]
  $region49: #{tpu_custom_call.1} parent=0
    _
  %s5 = ssub.s32 1, %s3
  %s6 = scalar_select 0, %s5, %s3
  $region1: #{tpu_custom_call.1} parent=0
    #allocation2 [shape = 'u8[262144]{0}', space=vmem, size = 0x40000, scoped, tag = 'input window, operand 0, single buffered']
    #allocation3 [shape = 's32[2]{0}', space=sflag, size = 0x8, scoped, tag = 'scoped memory for tpu_custom_call.1']
    #allocation4 [shape = 's32[2]{0}', space=sflag, size = 0x8, scoped, tag = 'scoped memory for tpu_custom_call.1']
    #allocation5 [shape = 'u8[524288]{0}', space=vmem, size = 0x80000, scoped, tag = 'input window, operand 1']
    #allocation6 [shape = 's32[2]{0}', space=sflag, size = 0x8, scoped, tag = 'scoped memory for tpu_custom_call.1']
    #allocation7 [shape = 'u8[524288]{0}', space=vmem, size = 0x80000, scoped, tag = 'output window, operand 0']
    %7 = vsyncpa [#allocation3], 0
    %8 = vsyncpa [#allocation6], 0
    %s9 = scalar_lea.sflag [#allocation6], 1
    %10 = vsyncpa %s9, 0
    %11 = vsyncpa [#allocation4], 0
    %s12 = scalar_lea.sflag [#allocation4], 1
    %13 = vsyncpa %s12, 0
    loop: start=0, step=1, limit=5
    $region2: #{tpu_custom_call.1} parent=1 // loop_pre_header
      _
    $region3: #{tpu_custom_call.1} parent=1 // loop_header
      %s15 = sphi 0, %s19
      %p16 = scmp.ge.s32.totalorder %s15, 5
      %s22 = sphi 0, %s34
      %s23 = sphi 0, %s30
      %s24 = sphi 0, %s22
      %s25 = sphi 0, %s23
      %s26 = sphi 0, %s24
      %s27 = sphi 0, %s25
      %s37 = sphi 0, %s39
      %s40 = sphi 0, %s37
      %s41 = sphi 0, %s40
      %s57 = sphi 0, %s41
      %s63 = sphi 0, %s65
      %s66 = sphi 0, %s63
      %s67 = sphi 0, %s66
      %s83 = sphi 0, %s67
      %s91 = sphi 0, %s93
      %s94 = sphi 0, %s91
      %s95 = sphi 0, %s94
      %s111 = sphi 0, %s95
    $region4: #{tpu_custom_call.1} parent=1 // loop_header_branch
      %18 = sbr.rel (%p16) target = $region8
    $region5: #{tpu_custom_call.1} parent=1 // loop_body
      %s20 = ssub.s32 %s15, 1
      %s21 = ssub.s32 %s15, 2
      %s28 = sadd.s32 1, %s23
      %p29 = scmp.ge.s32.totalorder %s28, 3
      %s30 = scalar_select %p29, 0, %s28
      %s31 = sadd.s32 1, %s22
      %s32 = scalar_select %p29, %s31, %s22
      %p33 = scmp.ge.s32.totalorder %s32, 1
      %s34 = scalar_select %p33, 0, %s32
      %s35 = ssub.s32 %s22, %s34
      %p36 = scmp.eq.s32.totalorder %s35, 0
      %s38 = sadd.s32 %s37, 1
      %s39 = scalar_select %p36, %s37, %s38
      %p42 = pneg %p36
      %p43 = scmp.eq.s32.totalorder %s15, 2
      %p44 = por %p42, %p43
      %p45 = scmp.ne.s32.totalorder %s37, %s40
      %p46 = scmp.eq.s32.totalorder %s15, 0
      %p47 = por %p45, %p46
      %p48 = scmp.ne.s32.totalorder %s37, %s40
      %p49 = scmp.eq.s32.totalorder %s20, 2
      %p50 = por %p48, %p49
      %p51 = scmp.ne.s32.totalorder %s40, %s41
      %p52 = scmp.eq.s32.totalorder %s20, 0
      %p53 = por %p51, %p52
      %p54 = scmp.ne.s32.totalorder %s40, %s41
      %p55 = scmp.eq.s32.totalorder %s21, 2
      %p56 = por %p54, %p55
      %p58 = scmp.ne.s32.totalorder %s41, %s57
      %p59 = scmp.eq.s32.totalorder %s21, 0
      %p60 = por %p58, %p59
      %s61 = ssub.s32 %s23, %s30
      %p62 = scmp.eq.s32.totalorder %s61, 0
      %s64 = sadd.s32 %s63, 1
      %s65 = scalar_select %p62, %s63, %s64
      %p68 = pneg %p62
      %p69 = scmp.eq.s32.totalorder %s15, 2
      %p70 = por %p68, %p69
      %p71 = scmp.ne.s32.totalorder %s63, %s66
      %p72 = scmp.eq.s32.totalorder %s15, 0
      %p73 = por %p71, %p72
      %p74 = scmp.ne.s32.totalorder %s63, %s66
      %p75 = scmp.eq.s32.totalorder %s20, 2
      %p76 = por %p74, %p75
      %p77 = scmp.ne.s32.totalorder %s66, %s67
      %p78 = scmp.eq.s32.totalorder %s20, 0
      %p79 = por %p77, %p78
      %p80 = scmp.ne.s32.totalorder %s66, %s67
      %p81 = scmp.eq.s32.totalorder %s21, 2
      %p82 = por %p80, %p81
      %p84 = scmp.ne.s32.totalorder %s67, %s83
      %p85 = scmp.eq.s32.totalorder %s21, 0
      %p86 = por %p84, %p85
      %s87 = ssub.s32 %s22, %s34
      %s88 = ssub.s32 %s23, %s30
      %s89 = sor.u32 %s87, %s88
      %p90 = scmp.eq.s32.totalorder %s89, 0
      %s92 = sadd.s32 %s91, 1
      %s93 = scalar_select %p90, %s91, %s92
      %p96 = pneg %p90
      %p97 = scmp.eq.s32.totalorder %s15, 2
      %p98 = por %p96, %p97
      %p99 = scmp.ne.s32.totalorder %s91, %s94
      %p100 = scmp.eq.s32.totalorder %s15, 0
      %p101 = por %p99, %p100
      %p102 = scmp.ne.s32.totalorder %s91, %s94
      %p103 = scmp.eq.s32.totalorder %s20, 2
      %p104 = por %p102, %p103
      %p105 = scmp.ne.s32.totalorder %s94, %s95
      %p106 = scmp.eq.s32.totalorder %s20, 0
      %p107 = por %p105, %p106
      %p108 = scmp.ne.s32.totalorder %s94, %s95
      %p109 = scmp.eq.s32.totalorder %s21, 2
      %p110 = por %p108, %p109
      %p112 = scmp.ne.s32.totalorder %s95, %s111
      %p113 = scmp.eq.s32.totalorder %s21, 0
      %p114 = por %p112, %p113
      %p115 = scmp.le.s32.totalorder 1, %s15
      %p116 = scmp.lt.s32.totalorder %s15, 4
      %p117 = pnand %p115, %p116
      %p118 = pneg %p117
      // Predicated region
      $region9: #{tpu_custom_call.1} parent=5 // pred_check
        _
      $region10: #{tpu_custom_call.1} parent=5 // pred_check_branch
        %120 = sbr.rel (%p117) target = $region12
      $region11: #{tpu_custom_call.1} parent=5 // pred_region
        %s121 = ssub.s32 %s15, 1
        // Predicated region
        $region13: #{tpu_custom_call.1} parent=11 // pred_check
          %p122 = pneg %p53
        $region14: #{tpu_custom_call.1} parent=11 // pred_check_branch
          %124 = sbr.rel (%p122) target = $region16
        $region15: #{tpu_custom_call.1} parent=11 // pred_region
          %s125 = smul.u32 32, %s24
          %s127 = ssub.s32 8192, 8192
          %128 = vsyncadd [#allocation3], %s127
          %s129 = smul.addr %s125, 2
          %s130 = smul.addr %s129, 128
          %s131 = scalar_lea.hbm %s0, %s130
          %s132 = sshll.u32 [#allocation2], 4
          %s133 = int_to_ptr.vmem [resolvable:$true] %s132
          %138 = dma.hbm_to_vmem [thread:$0]  %s131, 8192, %s133, [#allocation3], 256, 256, 16
        $region16: #{tpu_custom_call.1} parent=11 // pred_fallthru
          _
      $region12: #{tpu_custom_call.1} parent=5 // pred_fallthru
        _
      %p139 = scmp.lt.s32.totalorder %s15, 3
      // Predicated region
      $region17: #{tpu_custom_call.1} parent=5 // pred_check
        %p140 = pneg %p139
      $region18: #{tpu_custom_call.1} parent=5 // pred_check_branch
        %142 = sbr.rel (%p140) target = $region20
      $region19: #{tpu_custom_call.1} parent=5 // pred_region
        // Predicated region
        $region21: #{tpu_custom_call.1} parent=19 // pred_check
          %p143 = pneg %p73
        $region22: #{tpu_custom_call.1} parent=19 // pred_check_branch
          %145 = sbr.rel (%p143) target = $region24
        $region23: #{tpu_custom_call.1} parent=19 // pred_region
          %s146 = sand.u32 %s63, 1
          %s147 = scalar_lea.sflag [#allocation6], %s146
          %s148 = sand.u32 %s63, 1
          %s149 = smul.addr %s148, 512
          %s150 = scalar_lea.vmem [#allocation5], %s149
          %s151 = smul.u32 2, %s23
          %s153 = ssub.s32 8192, 8192
          %154 = vsyncadd %s147, %s153
          %s155 = smul.addr %s151, 128
          %s156 = scalar_lea.hbm %s1, %s155
          %s157 = sshll.u32 %s150, 4
          %s158 = int_to_ptr.vmem [resolvable:$true] %s157
          %163 = dma.hbm_to_vmem [thread:$0]  %s156, 8192, %s158, %s147, 768, 256, 16
        $region24: #{tpu_custom_call.1} parent=19 // pred_fallthru
          _
      $region20: #{tpu_custom_call.1} parent=5 // pred_fallthru
        _
      %p164 = scmp.le.s32.totalorder 1, %s15
      %p165 = scmp.lt.s32.totalorder %s15, 4
      %p166 = pnand %p164, %p165
      %p167 = pneg %p166
      // Predicated region
      $region25: #{tpu_custom_call.1} parent=5 // pred_check
        _
      $region26: #{tpu_custom_call.1} parent=5 // pred_check_branch
        %169 = sbr.rel (%p166) target = $region28
      $region27: #{tpu_custom_call.1} parent=5 // pred_region
        %s170 = ssub.s32 %s15, 1
        // Predicated region
        $region29: #{tpu_custom_call.1} parent=27 // pred_check
          %p171 = pneg %p53
        $region30: #{tpu_custom_call.1} parent=27 // pred_check_branch
          %173 = sbr.rel (%p171) target = $region32
        $region31: #{tpu_custom_call.1} parent=27 // pred_region
          %174 = dma.done [#allocation3], 8192
        $region32: #{tpu_custom_call.1} parent=27 // pred_fallthru
          _
        %s175 = sand.u32 %s66, 1
        %s176 = scalar_lea.sflag [#allocation6], %s175
        %s177 = sand.u32 %s66, 1
        %s178 = smul.addr %s177, 512
        %s179 = scalar_lea.vmem [#allocation5], %s178
        // Predicated region
        $region33: #{tpu_custom_call.1} parent=27 // pred_check
          %p180 = pneg %p79
        $region34: #{tpu_custom_call.1} parent=27 // pred_check_branch
          %182 = sbr.rel (%p180) target = $region36
        $region35: #{tpu_custom_call.1} parent=27 // pred_region
          %183 = dma.done %s176, 8192
        $region36: #{tpu_custom_call.1} parent=27 // pred_fallthru
          _
        %p184 = pneg %p53
        %p185 = pneg %p50
        %s186 = sand.u32 %s66, 1
        %s187 = scalar_lea.sflag [#allocation6], %s186
        %s188 = sand.u32 %s66, 1
        %s189 = smul.addr %s188, 512
        %s190 = scalar_lea.vmem [#allocation5], %s189
        %p191 = pneg %p79
        %p192 = pneg %p76
        %p193 = pneg %p107
        %p194 = pneg %p104
        %s195 = sand.u32 %s94, 1
        %s196 = scalar_lea.sflag [#allocation4], %s195
        %s197 = sand.u32 %s94, 1
        %s198 = smul.addr %s197, 512
        %s199 = scalar_lea.vmem [#allocation7], %s198
        %s200 = smul.u32 32, %s24
        %s201 = smul.u32 2, %s25
        %s202 = smul.u32 32, %s24
        %s203 = smul.u32 2, %s25
        %v204 = vld [vmem:[#allocation2] sm:$0xff]
        %v205 = vld [vmem:[#allocation2 + $0x8] sm:$0xff]
        %v206 = vld [vmem:[#allocation2 + $0x10] sm:$0xff]
        %v207 = vld [vmem:[#allocation2 + $0x18] sm:$0xff]
        %v208 = vld [vmem:[#allocation2 + $0x20] sm:$0xff]
        %v209 = vld [vmem:[#allocation2 + $0x28] sm:$0xff]
        %v210 = vld [vmem:[#allocation2 + $0x30] sm:$0xff]
        %v211 = vld [vmem:[#allocation2 + $0x38] sm:$0xff]
        %v212 = vld [vmem:[#allocation2 + $0x40] sm:$0xff]
        %v213 = vld [vmem:[#allocation2 + $0x48] sm:$0xff]
        %v214 = vld [vmem:[#allocation2 + $0x50] sm:$0xff]
        %v215 = vld [vmem:[#allocation2 + $0x58] sm:$0xff]
        %v216 = vld [vmem:[#allocation2 + $0x60] sm:$0xff]
        %v217 = vld [vmem:[#allocation2 + $0x68] sm:$0xff]
        %v218 = vld [vmem:[#allocation2 + $0x70] sm:$0xff]
        %v219 = vld [vmem:[#allocation2 + $0x78] sm:$0xff]
        %v220 = vld [vmem:[#allocation2 + $0x80] sm:$0xff]
        %v221 = vld [vmem:[#allocation2 + $0x88] sm:$0xff]
        %v222 = vld [vmem:[#allocation2 + $0x90] sm:$0xff]
        %v223 = vld [vmem:[#allocation2 + $0x98] sm:$0xff]
        %v224 = vld [vmem:[#allocation2 + $0xa0] sm:$0xff]
        %v225 = vld [vmem:[#allocation2 + $0xa8] sm:$0xff]
        %v226 = vld [vmem:[#allocation2 + $0xb0] sm:$0xff]
        %v227 = vld [vmem:[#allocation2 + $0xb8] sm:$0xff]
        %v228 = vld [vmem:[#allocation2 + $0xc0] sm:$0xff]
        %v229 = vld [vmem:[#allocation2 + $0xc8] sm:$0xff]
        %v230 = vld [vmem:[#allocation2 + $0xd0] sm:$0xff]
        %v231 = vld [vmem:[#allocation2 + $0xd8] sm:$0xff]
        %v232 = vld [vmem:[#allocation2 + $0xe0] sm:$0xff]
        %v233 = vld [vmem:[#allocation2 + $0xe8] sm:$0xff]
        %v234 = vld [vmem:[#allocation2 + $0xf0] sm:$0xff]
        %v235 = vld [vmem:[#allocation2 + $0xf8] sm:$0xff]
        %v236 = vld [vmem:[#allocation2 + $0x100] sm:$0xff]
        %v237 = vld [vmem:[#allocation2 + $0x108] sm:$0xff]
        %v238 = vld [vmem:[#allocation2 + $0x110] sm:$0xff]
        %v239 = vld [vmem:[#allocation2 + $0x118] sm:$0xff]
        %v240 = vld [vmem:[#allocation2 + $0x120] sm:$0xff]
        %v241 = vld [vmem:[#allocation2 + $0x128] sm:$0xff]
        %v242 = vld [vmem:[#allocation2 + $0x130] sm:$0xff]
        %v243 = vld [vmem:[#allocation2 + $0x138] sm:$0xff]
        %v244 = vld [vmem:[#allocation2 + $0x140] sm:$0xff]
        %v245 = vld [vmem:[#allocation2 + $0x148] sm:$0xff]
        %v246 = vld [vmem:[#allocation2 + $0x150] sm:$0xff]
        %v247 = vld [vmem:[#allocation2 + $0x158] sm:$0xff]
        %v248 = vld [vmem:[#allocation2 + $0x160] sm:$0xff]
        %v249 = vld [vmem:[#allocation2 + $0x168] sm:$0xff]
        %v250 = vld [vmem:[#allocation2 + $0x170] sm:$0xff]
        %v251 = vld [vmem:[#allocation2 + $0x178] sm:$0xff]
        %v252 = vld [vmem:[#allocation2 + $0x180] sm:$0xff]
        %v253 = vld [vmem:[#allocation2 + $0x188] sm:$0xff]
        %v254 = vld [vmem:[#allocation2 + $0x190] sm:$0xff]
        %v255 = vld [vmem:[#allocation2 + $0x198] sm:$0xff]
        %v256 = vld [vmem:[#allocation2 + $0x1a0] sm:$0xff]
        %v257 = vld [vmem:[#allocation2 + $0x1a8] sm:$0xff]
        %v258 = vld [vmem:[#allocation2 + $0x1b0] sm:$0xff]
        %v259 = vld [vmem:[#allocation2 + $0x1b8] sm:$0xff]
        %v260 = vld [vmem:[#allocation2 + $0x1c0] sm:$0xff]
        %v261 = vld [vmem:[#allocation2 + $0x1c8] sm:$0xff]
        %v262 = vld [vmem:[#allocation2 + $0x1d0] sm:$0xff]
        %v263 = vld [vmem:[#allocation2 + $0x1d8] sm:$0xff]
        %v264 = vld [vmem:[#allocation2 + $0x1e0] sm:$0xff]
        %v265 = vld [vmem:[#allocation2 + $0x1e8] sm:$0xff]
        %v266 = vld [vmem:[#allocation2 + $0x1f0] sm:$0xff]
        %v267 = vld [vmem:[#allocation2 + $0x1f8] sm:$0xff]
        %v268 = vld [vmem:[%s179] sm:$0xff]
        %v269 = vld [vmem:[%s179 + $0x8] sm:$0xff]
        %v270 = vld [vmem:[%s179 + $0x10] sm:$0xff]
        %v271 = vld [vmem:[%s179 + $0x18] sm:$0xff]
        %v272 = vld [vmem:[%s179 + $0x20] sm:$0xff]
        %v273 = vld [vmem:[%s179 + $0x28] sm:$0xff]
        %v274 = vld [vmem:[%s179 + $0x30] sm:$0xff]
        %v275 = vld [vmem:[%s179 + $0x38] sm:$0xff]
        %v276 = vld [vmem:[%s179 + $0x40] sm:$0xff]
        %v277 = vld [vmem:[%s179 + $0x48] sm:$0xff]
        %v278 = vld [vmem:[%s179 + $0x50] sm:$0xff]
        %v279 = vld [vmem:[%s179 + $0x58] sm:$0xff]
        %v280 = vld [vmem:[%s179 + $0x60] sm:$0xff]
        %v281 = vld [vmem:[%s179 + $0x68] sm:$0xff]
        %v282 = vld [vmem:[%s179 + $0x70] sm:$0xff]
        %v283 = vld [vmem:[%s179 + $0x78] sm:$0xff]
        %v284 = vld [vmem:[%s179 + $0x80] sm:$0xff]
        %v285 = vld [vmem:[%s179 + $0x88] sm:$0xff]
        %v286 = vld [vmem:[%s179 + $0x90] sm:$0xff]
        %v287 = vld [vmem:[%s179 + $0x98] sm:$0xff]
        %v288 = vld [vmem:[%s179 + $0xa0] sm:$0xff]
        %v289 = vld [vmem:[%s179 + $0xa8] sm:$0xff]
        %v290 = vld [vmem:[%s179 + $0xb0] sm:$0xff]
        %v291 = vld [vmem:[%s179 + $0xb8] sm:$0xff]
        %v292 = vld [vmem:[%s179 + $0xc0] sm:$0xff]
        %v293 = vld [vmem:[%s179 + $0xc8] sm:$0xff]
        %v294 = vld [vmem:[%s179 + $0xd0] sm:$0xff]
        %v295 = vld [vmem:[%s179 + $0xd8] sm:$0xff]
        %v296 = vld [vmem:[%s179 + $0xe0] sm:$0xff]
        %v297 = vld [vmem:[%s179 + $0xe8] sm:$0xff]
        %v298 = vld [vmem:[%s179 + $0xf0] sm:$0xff]
        %v299 = vld [vmem:[%s179 + $0xf8] sm:$0xff]
        %v300 = vld [vmem:[%s179 + $0x100] sm:$0xff]
        %v301 = vld [vmem:[%s179 + $0x108] sm:$0xff]
        %v302 = vld [vmem:[%s179 + $0x110] sm:$0xff]
        %v303 = vld [vmem:[%s179 + $0x118] sm:$0xff]
        %v304 = vld [vmem:[%s179 + $0x120] sm:$0xff]
        %v305 = vld [vmem:[%s179 + $0x128] sm:$0xff]
        %v306 = vld [vmem:[%s179 + $0x130] sm:$0xff]
        %v307 = vld [vmem:[%s179 + $0x138] sm:$0xff]
        %v308 = vld [vmem:[%s179 + $0x140] sm:$0xff]
        %v309 = vld [vmem:[%s179 + $0x148] sm:$0xff]
        %v310 = vld [vmem:[%s179 + $0x150] sm:$0xff]
        %v311 = vld [vmem:[%s179 + $0x158] sm:$0xff]
        %v312 = vld [vmem:[%s179 + $0x160] sm:$0xff]
        %v313 = vld [vmem:[%s179 + $0x168] sm:$0xff]
        %v314 = vld [vmem:[%s179 + $0x170] sm:$0xff]
        %v315 = vld [vmem:[%s179 + $0x178] sm:$0xff]
        %v316 = vld [vmem:[%s179 + $0x180] sm:$0xff]
        %v317 = vld [vmem:[%s179 + $0x188] sm:$0xff]
        %v318 = vld [vmem:[%s179 + $0x190] sm:$0xff]
        %v319 = vld [vmem:[%s179 + $0x198] sm:$0xff]
        %v320 = vld [vmem:[%s179 + $0x1a0] sm:$0xff]
        %v321 = vld [vmem:[%s179 + $0x1a8] sm:$0xff]
        %v322 = vld [vmem:[%s179 + $0x1b0] sm:$0xff]
        %v323 = vld [vmem:[%s179 + $0x1b8] sm:$0xff]
        %v324 = vld [vmem:[%s179 + $0x1c0] sm:$0xff]
        %v325 = vld [vmem:[%s179 + $0x1c8] sm:$0xff]
        %v326 = vld [vmem:[%s179 + $0x1d0] sm:$0xff]
        %v327 = vld [vmem:[%s179 + $0x1d8] sm:$0xff]
        %v328 = vld [vmem:[%s179 + $0x1e0] sm:$0xff]
        %v329 = vld [vmem:[%s179 + $0x1e8] sm:$0xff]
        %v330 = vld [vmem:[%s179 + $0x1f0] sm:$0xff]
        %v331 = vld [vmem:[%s179 + $0x1f8] sm:$0xff]
        %332 = vmatprep.subr.mxu0 %v269
        %333 = vmatpush1.msra.mxu0 %v268
        %334 = vmatprep.subr.mxu0 %v271
        %335 = vmatpush1.msra.mxu0 %v270
        %336 = vmatprep.subr.mxu0 %v273
        %337 = vmatpush1.msra.mxu0 %v272
        %338 = vmatprep.subr.mxu0 %v275
        %339 = vmatpush1.msra.mxu0 %v274
        %340 = vmatprep.subr.mxu0 %v277
        %341 = vmatpush1.msra.mxu0 %v276
        %342 = vmatprep.subr.mxu0 %v279
        %343 = vmatpush1.msra.mxu0 %v278
        %344 = vmatprep.subr.mxu0 %v281
        %345 = vmatpush1.msra.mxu0 %v280
        %346 = vmatprep.subr.mxu0 %v283
        %347 = vmatpush1.msra.mxu0 %v282
        %348 = vmatprep.subr.mxu0 %v285
        %349 = vmatpush1.msra.mxu0 %v284
        %350 = vmatprep.subr.mxu0 %v287
        %351 = vmatpush1.msra.mxu0 %v286
        %352 = vmatprep.subr.mxu0 %v289
        %353 = vmatpush1.msra.mxu0 %v288
        %354 = vmatprep.subr.mxu0 %v291
        %355 = vmatpush1.msra.mxu0 %v290
        %356 = vmatprep.subr.mxu0 %v293
        %357 = vmatpush1.msra.mxu0 %v292
        %358 = vmatprep.subr.mxu0 %v295
        %359 = vmatpush1.msra.mxu0 %v294
        %360 = vmatprep.subr.mxu0 %v297
        %361 = vmatpush1.msra.mxu0 %v296
        %362 = vmatprep.subr.mxu0 %v299
        %363 = vmatpush1.msra.mxu0 %v298
        %364 = vmatprep.subr.mxu0 %v301
        %365 = vmatpush1.msra.mxu0 %v300
        %366 = vmatprep.subr.mxu0 %v303
        %367 = vmatpush1.msra.mxu0 %v302
        %368 = vmatprep.subr.mxu0 %v305
        %369 = vmatpush1.msra.mxu0 %v304
        %370 = vmatprep.subr.mxu0 %v307
        %371 = vmatpush1.msra.mxu0 %v306
        %372 = vmatprep.subr.mxu0 %v309
        %373 = vmatpush1.msra.mxu0 %v308
        %374 = vmatprep.subr.mxu0 %v311
        %375 = vmatpush1.msra.mxu0 %v310
        %376 = vmatprep.subr.mxu0 %v313
        %377 = vmatpush1.msra.mxu0 %v312
        %378 = vmatprep.subr.mxu0 %v315
        %379 = vmatpush1.msra.mxu0 %v314
        %380 = vmatprep.subr.mxu0 %v317
        %381 = vmatpush1.msra.mxu0 %v316
        %382 = vmatprep.subr.mxu0 %v319
        %383 = vmatpush1.msra.mxu0 %v318
        %384 = vmatprep.subr.mxu0 %v321
        %385 = vmatpush1.msra.mxu0 %v320
        %386 = vmatprep.subr.mxu0 %v323
        %387 = vmatpush1.msra.mxu0 %v322
        %388 = vmatprep.subr.mxu0 %v325
        %389 = vmatpush1.msra.mxu0 %v324
        %390 = vmatprep.subr.mxu0 %v327
        %391 = vmatpush1.msra.mxu0 %v326
        %392 = vmatprep.subr.mxu0 %v329
        %393 = vmatpush1.msra.mxu0 %v328
        %394 = vmatprep.subr.mxu0 %v331
        %395 = vmatpush1.msra.mxu0 %v330
        %396 = vmatprep.mubr.f32.mxu0 %v205
        %397 = vmatmul.mubr.f32.gmra.mrb[0].mxu0 %v204
        %v398 = vpop.f32.mrb[0].mxu0
        %v399 = vadd.f32 0.0, %v398
        %v400 = vpop.f32.mrb[0].mxu0
        %v401 = vadd.f32 0.0, %v400
        %402 = vmatprep.mubr.f32.mxu0 %v207
        %403 = vmatmul.mubr.f32.gmra.mrb[0].mxu0 %v206
        %v404 = vpop.f32.mrb[0].mxu0
        %v405 = vadd.f32 0.0, %v404
        %v406 = vpop.f32.mrb[0].mxu0
        %v407 = vadd.f32 0.0, %v406
        %408 = vmatprep.mubr.f32.mxu0 %v209
        %409 = vmatmul.mubr.f32.gmra.mrb[0].mxu0 %v208
        %v410 = vpop.f32.mrb[0].mxu0
        %v411 = vadd.f32 0.0, %v410
        %v412 = vpop.f32.mrb[0].mxu0
        %v413 = vadd.f32 0.0, %v412
        %414 = vmatprep.mubr.f32.mxu0 %v211
        %415 = vmatmul.mubr.f32.gmra.mrb[0].mxu0 %v210
        %v416 = vpop.f32.mrb[0].mxu0
        %v417 = vadd.f32 0.0, %v416
        %v418 = vpop.f32.mrb[0].mxu0
        %v419 = vadd.f32 0.0, %v418
        %420 = vmatprep.mubr.f32.mxu0 %v213
        %421 = vmatmul.mubr.f32.gmra.mrb[0].mxu0 %v212
        %v422 = vpop.f32.mrb[0].mxu0
        %v423 = vadd.f32 0.0, %v422
        %v424 = vpop.f32.mrb[0].mxu0
        %v425 = vadd.f32 0.0, %v424
        %426 = vmatprep.mubr.f32.mxu0 %v215
        %427 = vmatmul.mubr.f32.gmra.mrb[0].mxu0 %v214
        %v428 = vpop.f32.mrb[0].mxu0
        %v429 = vadd.f32 0.0, %v428
        %v430 = vpop.f32.mrb[0].mxu0
        %v431 = vadd.f32 0.0, %v430
        %432 = vmatprep.mubr.f32.mxu0 %v217
        %433 = vmatmul.mubr.f32.gmra.mrb[0].mxu0 %v216
        %v434 = vpop.f32.mrb[0].mxu0
        %v435 = vadd.f32 0.0, %v434
        %v436 = vpop.f32.mrb[0].mxu0
        %v437 = vadd.f32 0.0, %v436
        %438 = vmatprep.mubr.f32.mxu0 %v219
        %439 = vmatmul.mubr.f32.gmra.mrb[0].mxu0 %v218
        %v440 = vpop.f32.mrb[0].mxu0
        %v441 = vadd.f32 0.0, %v440
        %v442 = vpop.f32.mrb[0].mxu0
        %v443 = vadd.f32 0.0, %v442
        %444 = vmatprep.mubr.f32.mxu0 %v221
        %445 = vmatmul.mubr.f32.gmra.mrb[0].mxu0 %v220
        %v446 = vpop.f32.mrb[0].mxu0
        %v447 = vadd.f32 0.0, %v446
        %v448 = vpop.f32.mrb[0].mxu0
        %v449 = vadd.f32 0.0, %v448
        %450 = vmatprep.mubr.f32.mxu0 %v223
        %451 = vmatmul.mubr.f32.gmra.mrb[0].mxu0 %v222
        %v452 = vpop.f32.mrb[0].mxu0
        %v453 = vadd.f32 0.0, %v452
        %v454 = vpop.f32.mrb[0].mxu0
        %v455 = vadd.f32 0.0, %v454
        %456 = vmatprep.mubr.f32.mxu0 %v225
        %457 = vmatmul.mubr.f32.gmra.mrb[0].mxu0 %v224
        %v458 = vpop.f32.mrb[0].mxu0
        %v459 = vadd.f32 0.0, %v458
        %v460 = vpop.f32.mrb[0].mxu0
        %v461 = vadd.f32 0.0, %v460
        %462 = vmatprep.mubr.f32.mxu0 %v227
        %463 = vmatmul.mubr.f32.gmra.mrb[0].mxu0 %v226
        %v464 = vpop.f32.mrb[0].mxu0
        %v465 = vadd.f32 0.0, %v464
        %v466 = vpop.f32.mrb[0].mxu0
        %v467 = vadd.f32 0.0, %v466
        %468 = vmatprep.mubr.f32.mxu0 %v229
        %469 = vmatmul.mubr.f32.gmra.mrb[0].mxu0 %v228
        %v470 = vpop.f32.mrb[0].mxu0
        %v471 = vadd.f32 0.0, %v470
        %v472 = vpop.f32.mrb[0].mxu0
        %v473 = vadd.f32 0.0, %v472
        %474 = vmatprep.mubr.f32.mxu0 %v231
        %475 = vmatmul.mubr.f32.gmra.mrb[0].mxu0 %v230
        %v476 = vpop.f32.mrb[0].mxu0
        %v477 = vadd.f32 0.0, %v476
        %v478 = vpop.f32.mrb[0].mxu0
        %v479 = vadd.f32 0.0, %v478
        %480 = vmatprep.mubr.f32.mxu0 %v233
        %481 = vmatmul.mubr.f32.gmra.mrb[0].mxu0 %v232
        %v482 = vpop.f32.mrb[0].mxu0
        %v483 = vadd.f32 0.0, %v482
        %v484 = vpop.f32.mrb[0].mxu0
        %v485 = vadd.f32 0.0, %v484
        %486 = vmatprep.mubr.f32.mxu0 %v235
        %487 = vmatmul.mubr.f32.gmra.mrb[0].mxu0 %v234
        %v488 = vpop.f32.mrb[0].mxu0
        %v489 = vadd.f32 0.0, %v488
        %v490 = vpop.f32.mrb[0].mxu0
        %v491 = vadd.f32 0.0, %v490
        %492 = vmatprep.mubr.f32.mxu0 %v237
        %493 = vmatmul.mubr.f32.gmra.mrb[0].mxu0 %v236
        %v494 = vpop.f32.mrb[0].mxu0
        %v495 = vadd.f32 0.0, %v494
        %v496 = vpop.f32.mrb[0].mxu0
        %v497 = vadd.f32 0.0, %v496
        %498 = vmatprep.mubr.f32.mxu0 %v239
        %499 = vmatmul.mubr.f32.gmra.mrb[0].mxu0 %v238
        %v500 = vpop.f32.mrb[0].mxu0
        %v501 = vadd.f32 0.0, %v500
        %v502 = vpop.f32.mrb[0].mxu0
        %v503 = vadd.f32 0.0, %v502
        %504 = vmatprep.mubr.f32.mxu0 %v241
        %505 = vmatmul.mubr.f32.gmra.mrb[0].mxu0 %v240
        %v506 = vpop.f32.mrb[0].mxu0
        %v507 = vadd.f32 0.0, %v506
        %v508 = vpop.f32.mrb[0].mxu0
        %v509 = vadd.f32 0.0, %v508
        %510 = vmatprep.mubr.f32.mxu0 %v243
        %511 = vmatmul.mubr.f32.gmra.mrb[0].mxu0 %v242
        %v512 = vpop.f32.mrb[0].mxu0
        %v513 = vadd.f32 0.0, %v512
        %v514 = vpop.f32.mrb[0].mxu0
        %v515 = vadd.f32 0.0, %v514
        %516 = vmatprep.mubr.f32.mxu0 %v245
        %517 = vmatmul.mubr.f32.gmra.mrb[0].mxu0 %v244
        %v518 = vpop.f32.mrb[0].mxu0
        %v519 = vadd.f32 0.0, %v518
        %v520 = vpop.f32.mrb[0].mxu0
        %v521 = vadd.f32 0.0, %v520
        %522 = vmatprep.mubr.f32.mxu0 %v247
        %523 = vmatmul.mubr.f32.gmra.mrb[0].mxu0 %v246
        %v524 = vpop.f32.mrb[0].mxu0
        %v525 = vadd.f32 0.0, %v524
        %v526 = vpop.f32.mrb[0].mxu0
        %v527 = vadd.f32 0.0, %v526
        %528 = vmatprep.mubr.f32.mxu0 %v249
        %529 = vmatmul.mubr.f32.gmra.mrb[0].mxu0 %v248
        %v530 = vpop.f32.mrb[0].mxu0
        %v531 = vadd.f32 0.0, %v530
        %v532 = vpop.f32.mrb[0].mxu0
        %v533 = vadd.f32 0.0, %v532
        %534 = vmatprep.mubr.f32.mxu0 %v251
        %535 = vmatmul.mubr.f32.gmra.mrb[0].mxu0 %v250
        %v536 = vpop.f32.mrb[0].mxu0
        %v537 = vadd.f32 0.0, %v536
        %v538 = vpop.f32.mrb[0].mxu0
        %v539 = vadd.f32 0.0, %v538
        %540 = vmatprep.mubr.f32.mxu0 %v253
        %541 = vmatmul.mubr.f32.gmra.mrb[0].mxu0 %v252
        %v542 = vpop.f32.mrb[0].mxu0
        %v543 = vadd.f32 0.0, %v542
        %v544 = vpop.f32.mrb[0].mxu0
        %v545 = vadd.f32 0.0, %v544
        %546 = vmatprep.mubr.f32.mxu0 %v255
        %547 = vmatmul.mubr.f32.gmra.mrb[0].mxu0 %v254
        %v548 = vpop.f32.mrb[0].mxu0
        %v549 = vadd.f32 0.0, %v548
        %v550 = vpop.f32.mrb[0].mxu0
        %v551 = vadd.f32 0.0, %v550
        %552 = vmatprep.mubr.f32.mxu0 %v257
        %553 = vmatmul.mubr.f32.gmra.mrb[0].mxu0 %v256
        %v554 = vpop.f32.mrb[0].mxu0
        %v555 = vadd.f32 0.0, %v554
        %v556 = vpop.f32.mrb[0].mxu0
        %v557 = vadd.f32 0.0, %v556
        %558 = vmatprep.mubr.f32.mxu0 %v259
        %559 = vmatmul.mubr.f32.gmra.mrb[0].mxu0 %v258
        %v560 = vpop.f32.mrb[0].mxu0
        %v561 = vadd.f32 0.0, %v560
        %v562 = vpop.f32.mrb[0].mxu0
        %v563 = vadd.f32 0.0, %v562
        %564 = vmatprep.mubr.f32.mxu0 %v261
        %565 = vmatmul.mubr.f32.gmra.mrb[0].mxu0 %v260
        %v566 = vpop.f32.mrb[0].mxu0
        %v567 = vadd.f32 0.0, %v566
        %v568 = vpop.f32.mrb[0].mxu0
        %v569 = vadd.f32 0.0, %v568
        %570 = vmatprep.mubr.f32.mxu0 %v263
        %571 = vmatmul.mubr.f32.gmra.mrb[0].mxu0 %v262
        %v572 = vpop.f32.mrb[0].mxu0
        %v573 = vadd.f32 0.0, %v572
        %v574 = vpop.f32.mrb[0].mxu0
        %v575 = vadd.f32 0.0, %v574
        %576 = vmatprep.mubr.f32.mxu0 %v265
        %577 = vmatmul.mubr.f32.gmra.mrb[0].mxu0 %v264
        %v578 = vpop.f32.mrb[0].mxu0
        %v579 = vadd.f32 0.0, %v578
        %v580 = vpop.f32.mrb[0].mxu0
        %v581 = vadd.f32 0.0, %v580
        %582 = vmatprep.mubr.f32.mxu0 %v267
        %583 = vmatmul.mubr.f32.gmra.mrb[0].mxu0 %v266
        %v584 = vpop.f32.mrb[0].mxu0
        %v585 = vadd.f32 0.0, %v584
        %v586 = vpop.f32.mrb[0].mxu0
        %v587 = vadd.f32 0.0, %v586
        %588 = vdwg.mxu0
        %589 = vst [vmem:[%s199] sm:$0xff] %v399
        %590 = vst [vmem:[%s199 + $0x8] sm:$0xff] %v401
        %591 = vst [vmem:[%s199 + $0x10] sm:$0xff] %v405
        %592 = vst [vmem:[%s199 + $0x18] sm:$0xff] %v407
        %593 = vst [vmem:[%s199 + $0x20] sm:$0xff] %v411
        %594 = vst [vmem:[%s199 + $0x28] sm:$0xff] %v413
        %595 = vst [vmem:[%s199 + $0x30] sm:$0xff] %v417
        %596 = vst [vmem:[%s199 + $0x38] sm:$0xff] %v419
        %597 = vst [vmem:[%s199 + $0x40] sm:$0xff] %v423
        %598 = vst [vmem:[%s199 + $0x48] sm:$0xff] %v425
        %599 = vst [vmem:[%s199 + $0x50] sm:$0xff] %v429
        %600 = vst [vmem:[%s199 + $0x58] sm:$0xff] %v431
        %601 = vst [vmem:[%s199 + $0x60] sm:$0xff] %v435
        %602 = vst [vmem:[%s199 + $0x68] sm:$0xff] %v437
        %603 = vst [vmem:[%s199 + $0x70] sm:$0xff] %v441
        %604 = vst [vmem:[%s199 + $0x78] sm:$0xff] %v443
        %605 = vst [vmem:[%s199 + $0x80] sm:$0xff] %v447
        %606 = vst [vmem:[%s199 + $0x88] sm:$0xff] %v449
        %607 = vst [vmem:[%s199 + $0x90] sm:$0xff] %v453
        %608 = vst [vmem:[%s199 + $0x98] sm:$0xff] %v455
        %609 = vst [vmem:[%s199 + $0xa0] sm:$0xff] %v459
        %610 = vst [vmem:[%s199 + $0xa8] sm:$0xff] %v461
        %611 = vst [vmem:[%s199 + $0xb0] sm:$0xff] %v465
        %612 = vst [vmem:[%s199 + $0xb8] sm:$0xff] %v467
        %613 = vst [vmem:[%s199 + $0xc0] sm:$0xff] %v471
        %614 = vst [vmem:[%s199 + $0xc8] sm:$0xff] %v473
        %615 = vst [vmem:[%s199 + $0xd0] sm:$0xff] %v477
        %616 = vst [vmem:[%s199 + $0xd8] sm:$0xff] %v479
        %617 = vst [vmem:[%s199 + $0xe0] sm:$0xff] %v483
        %618 = vst [vmem:[%s199 + $0xe8] sm:$0xff] %v485
        %619 = vst [vmem:[%s199 + $0xf0] sm:$0xff] %v489
        %620 = vst [vmem:[%s199 + $0xf8] sm:$0xff] %v491
        %621 = vst [vmem:[%s199 + $0x100] sm:$0xff] %v495
        %622 = vst [vmem:[%s199 + $0x108] sm:$0xff] %v497
        %623 = vst [vmem:[%s199 + $0x110] sm:$0xff] %v501
        %624 = vst [vmem:[%s199 + $0x118] sm:$0xff] %v503
        %625 = vst [vmem:[%s199 + $0x120] sm:$0xff] %v507
        %626 = vst [vmem:[%s199 + $0x128] sm:$0xff] %v509
        %627 = vst [vmem:[%s199 + $0x130] sm:$0xff] %v513
        %628 = vst [vmem:[%s199 + $0x138] sm:$0xff] %v515
        %629 = vst [vmem:[%s199 + $0x140] sm:$0xff] %v519
        %630 = vst [vmem:[%s199 + $0x148] sm:$0xff] %v521
        %631 = vst [vmem:[%s199 + $0x150] sm:$0xff] %v525
        %632 = vst [vmem:[%s199 + $0x158] sm:$0xff] %v527
        %633 = vst [vmem:[%s199 + $0x160] sm:$0xff] %v531
        %634 = vst [vmem:[%s199 + $0x168] sm:$0xff] %v533
        %635 = vst [vmem:[%s199 + $0x170] sm:$0xff] %v537
        %636 = vst [vmem:[%s199 + $0x178] sm:$0xff] %v539
        %637 = vst [vmem:[%s199 + $0x180] sm:$0xff] %v543
        %638 = vst [vmem:[%s199 + $0x188] sm:$0xff] %v545
        %639 = vst [vmem:[%s199 + $0x190] sm:$0xff] %v549
        %640 = vst [vmem:[%s199 + $0x198] sm:$0xff] %v551
        %641 = vst [vmem:[%s199 + $0x1a0] sm:$0xff] %v555
        %642 = vst [vmem:[%s199 + $0x1a8] sm:$0xff] %v557
        %643 = vst [vmem:[%s199 + $0x1b0] sm:$0xff] %v561
        %644 = vst [vmem:[%s199 + $0x1b8] sm:$0xff] %v563
        %645 = vst [vmem:[%s199 + $0x1c0] sm:$0xff] %v567
        %646 = vst [vmem:[%s199 + $0x1c8] sm:$0xff] %v569
        %647 = vst [vmem:[%s199 + $0x1d0] sm:$0xff] %v573
        %648 = vst [vmem:[%s199 + $0x1d8] sm:$0xff] %v575
        %649 = vst [vmem:[%s199 + $0x1e0] sm:$0xff] %v579
        %650 = vst [vmem:[%s199 + $0x1e8] sm:$0xff] %v581
        %651 = vst [vmem:[%s199 + $0x1f0] sm:$0xff] %v585
        %652 = vst [vmem:[%s199 + $0x1f8] sm:$0xff] %v587
        %s653 = sand.u32 %s94, 1
        %s654 = scalar_lea.sflag [#allocation4], %s653
        %s655 = sand.u32 %s94, 1
        %s656 = smul.addr %s655, 512
        %s657 = scalar_lea.vmem [#allocation7], %s656
        // Predicated region
        $region37: #{tpu_custom_call.1} parent=27 // pred_check
          %p658 = pneg %p104
        $region38: #{tpu_custom_call.1} parent=27 // pred_check_branch
          %660 = sbr.rel (%p658) target = $region40
        $region39: #{tpu_custom_call.1} parent=27 // pred_region
          %s661 = smul.u32 32, %s24
          %s662 = smul.u32 2, %s25
          %s664 = ssub.s32 8192, 8192
          %665 = vsyncadd %s654, %s664
          %s666 = smul.addr %s661, 6
          %s667 = sadd.s32 %s662, %s666
          %s668 = smul.addr %s667, 128
          %s669 = scalar_lea.hbm %s2, %s668
          %s670 = sshll.u32 %s657, 4
          %s671 = int_to_ptr.vmem [resolvable:$true] %s670
          %676 = dma.vmem_to_hbm [thread:$0]  %s671, 8192, %s669, %s654, 256, 768, 16
        $region40: #{tpu_custom_call.1} parent=27 // pred_fallthru
          _
      $region28: #{tpu_custom_call.1} parent=5 // pred_fallthru
        _
      %p677 = scmp.le.s32.totalorder 2, %s15
      // Predicated region
      $region41: #{tpu_custom_call.1} parent=5 // pred_check
        %p678 = pneg %p677
      $region42: #{tpu_custom_call.1} parent=5 // pred_check_branch
        %680 = sbr.rel (%p678) target = $region44
      $region43: #{tpu_custom_call.1} parent=5 // pred_region
        %s681 = ssub.s32 %s15, 2
        // Predicated region
        $region45: #{tpu_custom_call.1} parent=43 // pred_check
          %p682 = pneg %p110
        $region46: #{tpu_custom_call.1} parent=43 // pred_check_branch
          %684 = sbr.rel (%p682) target = $region48
        $region47: #{tpu_custom_call.1} parent=43 // pred_region
          %s685 = sand.u32 %s95, 1
          %s686 = scalar_lea.sflag [#allocation4], %s685
          %s687 = sand.u32 %s95, 1
          %s688 = smul.addr %s687, 512
          %s689 = scalar_lea.vmem [#allocation7], %s688
          %690 = dma.done %s686, 8192
        $region48: #{tpu_custom_call.1} parent=43 // pred_fallthru
          _
      $region44: #{tpu_custom_call.1} parent=5 // pred_fallthru
        _
    $region6: #{tpu_custom_call.1} parent=1 // loop_footer
      %s19 = sadd.s32 1, %s15
    $region7: #{tpu_custom_call.1} parent=1 // loop_footer_branch
      %14 = sbr.rel target = $region3
    $region8: #{tpu_custom_call.1} parent=1 // loop_exit
      _
    %691 = vsyncpa [#allocation3], 1
    %s692 = scalar_lea.sflag [#allocation3], 1
    %693 = vsyncpa %s692, 1
    %694 = vsyncpa [#allocation6], 1
    %s695 = scalar_lea.sflag [#allocation6], 1
    %696 = vsyncpa %s695, 1
    %697 = vsyncpa [#allocation4], 1
    %s698 = scalar_lea.sflag [#allocation4], 1
    %699 = vsyncpa %s698, 1

</llo_original>
